<compile_context>
chip_gen: v5e
topology: v5e:2x2
jax: 0.10.0
libtpu: 0.0.40
codegen_flags: <defaults>
</compile_context>

<pallas_src>
import functools

import jax
import jax.numpy as jnp
from jax import lax
from jax.experimental import pallas as pl
from jax.experimental.pallas import tpu as pltpu

EMB_DIM = 32
SEQ_LEN = 8
BATCH = 8
VOCAB = 50
NUM_POOLING = 1  # args.num_pooling of the stand-in base model

MASK_ID = VOCAB                                   # mask token lives in row VOCAB
EMB_ROWS = ((VOCAB + 1 + 7) // 8) * 8             # augmented table, padded to 8-row tiles
SLAB_ROWS = EMB_ROWS + EMB_DIM + 8                # emb_aug | proj_w | proj_b (padded row block)


# ----------------------------------------------------------------------------
# Fused kernel: encoder + normalize + AdaptSSR contrastive loss
# ----------------------------------------------------------------------------
def pretrain_kernel(slab_ref, seq_ref, msk_ref, out_ref, *, bz, seq_len,
                    emb_rows, dim, mask_id, num_pooling):
    nb = 2 * bz                       # unique sequences (seq_1, seq_2 stacked)
    zero = jnp.float32(0.0)
    one = jnp.float32(1.0)
    inv_s = jnp.float32(1.0 / seq_len)
    neg_big = jnp.float32(-1e30)

    # ---- static, tile-aligned views into the coalesced weight slab ----------
    emb = slab_ref[0:emb_rows, :]                            # (emb_rows, D)
    w = slab_ref[emb_rows:emb_rows + dim, :]                 # (D, D)
    b = slab_ref[emb_rows + dim:emb_rows + dim + 1, :]       # (1, D)

    # ---- embedding lookup + mask-token substitution + mean pool -------------
    # mask token = embedding row `mask_id`, so the substitution is a single
    # select on the int32 id stream; pooling is a one-hot counts @ emb matmul
    # (MXU) with the 1/S scale applied once afterwards.
    seq = seq_ref[...]                                       # (2B, S) int32
    msk = msk_ref[...]                                       # (2B, S) int32
    ids = jnp.where(msk != 0, jnp.int32(mask_id), seq)       # (2B, S)

    iota_v = lax.broadcasted_iota(jnp.int32, (nb, emb_rows), 1)
    counts = jnp.zeros((nb, emb_rows), jnp.float32)
    for t in range(seq_len):                                 # static unroll (S=8)
        counts = counts + (iota_v == ids[:, t:t + 1]).astype(jnp.float32)

    pooled = jnp.dot(counts, emb, preferred_element_type=jnp.float32) * inv_s
    # base-model projection (Linear(D, D))
    ur = jnp.dot(pooled, w, preferred_element_type=jnp.float32) + b  # (2B, D)

    # ---- F.normalize(p=2, dim=-1): torch clamps ||ur|| at 1e-12 -------------
    ssq = jnp.sum(ur * ur, axis=-1, keepdims=True)
    urn = ur * lax.rsqrt(jnp.maximum(ssq, jnp.float32(1e-24)))       # (2B, D)

    # ---- single Gram matrix replaces the 8 reference matmuls ----------------
    g = lax.dot_general(urn, urn, (((1,), (1,)), ((), ())),
                        preferred_element_type=jnp.float32)          # (2B, 2B)
    if num_pooling != 1:
        g = g * jnp.float32(1.0 / num_pooling)

    row = lax.broadcasted_iota(jnp.int32, (nb, nb), 0)
    col = lax.broadcasted_iota(jnp.int32, (nb, nb), 1)
    d = row - col
    diag = d == 0                                        # diagonals of G11/G22
    cross_diag = jnp.logical_or(d == bz, d == -bz)       # diagonals of G12/G21
    any_diag = jnp.logical_or(diag, cross_diag)

    # sim_anchor_pos (pos == anchor for the deterministic stand-in encoder)
    d_self = jnp.sum(jnp.where(diag, g, zero), axis=-1, keepdims=True)    # (2B,1)
    # sim_anchor_semi (both columns identical since pos == anchor copy)
    d_cross = jnp.sum(jnp.where(cross_diag, g, zero), axis=-1, keepdims=True)
    # max over remove_diag(neg-sim matrices): every column except the two
    # block-diagonal entries is a negative sample.
    max_neg = jnp.max(jnp.where(any_diag, neg_big, g), axis=-1, keepdims=True)

    diff_pos_semi = d_self - d_cross                     # (2B, 1)
    diff_semi_neg = d_cross - max_neg                    # (2B, 1)

    # coef = 1 - mean(sim_anchor_semi); identical for both branches (Gram sym).
    coef = one - jnp.sum(d_cross) * jnp.float32(1.0 / nb)
    diff = coef * diff_pos_semi + (one - coef) * diff_semi_neg

    # batch_loss = (loss_1 + loss_2)/2 = -mean(logsigmoid(diff)) over 2B rows.
    logsig = jnp.minimum(diff, zero) - jnp.log1p(jnp.exp(-jnp.abs(diff)))
    batch_loss = -jnp.sum(logsig) * jnp.float32(1.0 / nb)

    # hit counters (reference averages the two branches; duplicated semi
    # columns / matrices contribute the exact multiplicities 1 and 2 below).
    hit_pos_semi = jnp.sum((d_self > d_cross).astype(jnp.float32))
    hit_neg = jnp.logical_and(jnp.logical_not(any_diag), d_cross > g)
    hit_semi_neg = jnp.float32(2.0) * jnp.sum(hit_neg.astype(jnp.float32))

    out_ref[0] = batch_loss
    out_ref[1] = hit_pos_semi
    out_ref[2] = hit_semi_neg


# ----------------------------------------------------------------------------
# Forward pass wrapper (single fused pallas_call, zero per-step wrapper ops)
# ----------------------------------------------------------------------------
def pretrain_forward(slab, seq, msk):
    """slab: (SLAB_ROWS, D) f32 weight slab; seq/msk: (2B, S) int32 pre-stacked."""
    nb, seq_len = seq.shape
    bz = nb // 2
    dim = slab.shape[1]

    kern = functools.partial(pretrain_kernel, bz=bz, seq_len=seq_len,
                             emb_rows=EMB_ROWS, dim=dim, mask_id=MASK_ID,
                             num_pooling=NUM_POOLING)

    flops = 2 * nb * (EMB_ROWS * dim + dim * dim + dim * nb)
    bytes_accessed = (slab.size * 4 + seq.size * 4 + msk.size * 4 + 3 * 4)
    cost = pl.CostEstimate(flops=flops, transcendentals=4 * nb,
                           bytes_accessed=bytes_accessed)

    # NOTE: at nb=16, D=32 a single grid-less call on one TC is optimal. If
    # many micro-batches are stacked (>=128 rows), add a leading "parallel"
    # grid axis over row blocks (shards across v7x's 2 TCs) and tile the Gram.
    out = pl.pallas_call(
        kern,
        out_shape=jax.ShapeDtypeStruct((3,), jnp.float32),
        in_specs=[pl.BlockSpec(memory_space=pltpu.MemorySpace.VMEM)] * 3,
        out_specs=pl.BlockSpec(memory_space=pltpu.MemorySpace.SMEM),
        cost_estimate=cost,
    )(slab, seq, msk)
    return out[0], out[1], out[2]


# ----------------------------------------------------------------------------
# Parameter-init-time weight slab (built once, not per step)
# ----------------------------------------------------------------------------
def make_param_slab(params):
    slab = jnp.zeros((SLAB_ROWS, EMB_DIM), jnp.float32)
    slab = slab.at[:VOCAB].set(params["item_embedding"])
    slab = slab.at[MASK_ID].set(params["mask_token"][0])           # mask token row
    slab = slab.at[EMB_ROWS:EMB_ROWS + EMB_DIM].set(params["proj_w"])
    slab = slab.at[EMB_ROWS + EMB_DIM].set(params["proj_b"][0])
    return slab


# ----------------------------------------------------------------------------
# Pure-JAX reference of the same forward (for a correctness check)
# ----------------------------------------------------------------------------
def _remove_diag(x):
    n = x.shape[0]
    return x.reshape(-1)[:-1].reshape(n - 1, n + 1)[:, 1:].reshape(n, -1)


def reference_forward(params, item_seq_1, item_seq_2, mask_idx_1, mask_idx_2):
    emb, mtok = params["item_embedding"], params["mask_token"]
    w, b = params["proj_w"], params["proj_b"]
    bz = item_seq_1.shape[0]
    e1 = jnp.where(mask_idx_1[..., None], mtok[0], emb[item_seq_1])
    e2 = jnp.where(mask_idx_2[..., None], mtok[0], emb[item_seq_2])
    total = jnp.concatenate([e1, e1, e2, e2], axis=0)
    ur = jnp.mean(total, axis=1) @ w + b
    ur = ur / jnp.maximum(jnp.sqrt(jnp.sum(ur * ur, -1, keepdims=True)), 1e-12)
    a1, p1 = ur[:bz], ur[bz:2 * bz]
    a2, p2 = ur[2 * bz:3 * bz], ur[3 * bz:]

    def branch(a, p, oa, op):
        npool = NUM_POOLING
        sim_ap = jnp.sum(a * p, -1, keepdims=True) / npool
        semi = jnp.concatenate([jnp.sum(a * oa, -1, keepdims=True),
                                jnp.sum(a * op, -1, keepdims=True)], -1) / npool
        neg = jnp.concatenate([_remove_diag(a @ a.T), _remove_diag(a @ p.T),
                               _remove_diag(a @ oa.T), _remove_diag(a @ op.T)],
                              -1) / npool
        diff_ps = jnp.min(sim_ap, -1) - jnp.max(semi, -1)
        hit_pos = jnp.sum(sim_ap > semi)
        diff_sn = jnp.min(semi, -1) - jnp.max(neg, -1)
        hit_neg = jnp.sum(semi[:, :, None] > neg[:, None, :])
        coef = 1.0 - jnp.mean(semi)
        diff = coef * diff_ps + (1.0 - coef) * diff_sn
        return -jnp.mean(jax.nn.log_sigmoid(diff)), hit_pos, hit_neg

    l1, hp1, hn1 = branch(a1, p1, a2, p2)
    l2, hp2, hn2 = branch(a2, p2, a1, p1)
    return (l1 + l2) / 2, (hp1 + hp2) / 2, (hn1 + hn2) / 2


# ----------------------------------------------------------------------------
def make_params(key):
    k_emb, k_mask, k_w = jax.random.split(key, 3)
    return {
        # nn.Embedding / nn.Linear weights: normal(0, 0.02); bias zero
        "item_embedding": 0.02 * jax.random.normal(k_emb, (VOCAB, EMB_DIM),
                                                   dtype=jnp.float32),
        "mask_token": 0.02 * jax.random.normal(k_mask, (1, EMB_DIM),
                                               dtype=jnp.float32),
        "proj_w": 0.02 * jax.random.normal(k_w, (EMB_DIM, EMB_DIM),
                                           dtype=jnp.float32),
        "proj_b": jnp.zeros((1, EMB_DIM), dtype=jnp.float32),
    }


if __name__ == "__main__":
    key = jax.random.PRNGKey(0)
    k_params, k_s1, k_s2, k_m1, k_m2 = jax.random.split(key, 5)

    params = make_params(k_params)
    item_seq_1 = jax.random.randint(k_s1, (BATCH, SEQ_LEN), 1, VOCAB,
                                    dtype=jnp.int32)
    item_seq_2 = jax.random.randint(k_s2, (BATCH, SEQ_LEN), 1, VOCAB,
                                    dtype=jnp.int32)
    mask_idx_1 = jax.random.bernoulli(k_m1, 0.2, (BATCH, SEQ_LEN))
    mask_idx_2 = jax.random.bernoulli(k_m2, 0.2, (BATCH, SEQ_LEN))

    # --- "data pipeline" / param-init work done ONCE, outside the jitted step
    slab = make_param_slab(params)
    seq = jnp.concatenate([item_seq_1, item_seq_2], axis=0).astype(jnp.int32)
    msk = jnp.concatenate([mask_idx_1, mask_idx_2], axis=0).astype(jnp.int32)

    fwd = jax.jit(pretrain_forward)
    outs = jax.block_until_ready(fwd(slab, seq, msk))
    batch_loss, hit_pos_semi, hit_semi_neg = outs

    # correctness check against the pure-JAX reference of the same forward
    ref_loss, ref_hp, ref_hn = reference_forward(
        params, item_seq_1, item_seq_2, mask_idx_1, mask_idx_2)
    assert jnp.allclose(batch_loss, ref_loss, rtol=1e-4, atol=1e-5), \
        (batch_loss, ref_loss)
    assert jnp.allclose(hit_pos_semi, jnp.float32(ref_hp), atol=1e-3), \
        (hit_pos_semi, ref_hp)
    assert jnp.allclose(hit_semi_neg, jnp.float32(ref_hn), atol=1e-3), \
        (hit_semi_neg, ref_hn)

    print("KERNEL_OK")
</pallas_src>

<mosaic_0001>
module attributes {stable_mosaic.version = 11 : i64} {
  func.func @pretrain_kernel(%arg0: memref<96x32xf32, #tpu.memory_space<vmem>>, %arg1: memref<16x8xi32, #tpu.memory_space<vmem>>, %arg2: memref<16x8xi32, #tpu.memory_space<vmem>>, %arg3: memref<3xf32, #tpu.memory_space<smem>>) attributes {dimension_semantics = [], scalar_prefetch = 0 : i64, scratch_operands = 0 : i64, tpu.core_type = #tpu.core_type<tc>} {
    %c0 = arith.constant 0 : index
    %c0_0 = arith.constant 0 : index
    %0 = vector.load %arg0[%c0, %c0_0] : memref<96x32xf32, #tpu.memory_space<vmem>>, vector<56x32xf32>
    %c56 = arith.constant 56 : index
    %c0_1 = arith.constant 0 : index
    %1 = vector.load %arg0[%c56, %c0_1] : memref<96x32xf32, #tpu.memory_space<vmem>>, vector<32x32xf32>
    %c88 = arith.constant 88 : index
    %c0_2 = arith.constant 0 : index
    %2 = vector.load %arg0[%c88, %c0_2] : memref<96x32xf32, #tpu.memory_space<vmem>>, vector<1x32xf32>
    %c0_3 = arith.constant 0 : index
    %c0_4 = arith.constant 0 : index
    %3 = vector.load %arg1[%c0_3, %c0_4] : memref<16x8xi32, #tpu.memory_space<vmem>>, vector<16x8xi32>
    %c0_5 = arith.constant 0 : index
    %c0_6 = arith.constant 0 : index
    %4 = vector.load %arg2[%c0_5, %c0_6] : memref<16x8xi32, #tpu.memory_space<vmem>>, vector<16x8xi32>
    %c0_i32 = arith.constant 0 : i32
    %5 = vector.broadcast %c0_i32 : i32 to vector<16x8xi32>
    %6 = arith.cmpi ne, %4, %5 : vector<16x8xi32>
    %c50_i32 = arith.constant 50 : i32
    %7 = vector.broadcast %c50_i32 : i32 to vector<16x8xi32>
    %8 = arith.select %6, %7, %3 : vector<16x8xi1>, vector<16x8xi32>
    %9 = tpu.iota {dimensions = array<i32: 1>} : vector<16x56xi32>
    %cst = arith.constant 0.000000e+00 : f32
    %10 = vector.broadcast %cst : f32 to vector<16x56xf32>
    %11 = vector.extract_strided_slice %8 {offsets = [0, 0], sizes = [16, 1], strides = [1, 1]} : vector<16x8xi32> to vector<16x1xi32>
    %12 = vector.broadcast %11 : vector<16x1xi32> to vector<16x56xi32>
    %13 = arith.cmpi eq, %9, %12 : vector<16x56xi32>
    %14 = arith.extui %13 : vector<16x56xi1> to vector<16x56xi32>
    %15 = arith.sitofp %14 : vector<16x56xi32> to vector<16x56xf32>
    %16 = arith.addf %10, %15 : vector<16x56xf32>
    %17 = vector.extract_strided_slice %8 {offsets = [0, 1], sizes = [16, 1], strides = [1, 1]} : vector<16x8xi32> to vector<16x1xi32>
    %18 = vector.broadcast %17 : vector<16x1xi32> to vector<16x56xi32>
    %19 = arith.cmpi eq, %9, %18 : vector<16x56xi32>
    %20 = arith.extui %19 : vector<16x56xi1> to vector<16x56xi32>
    %21 = arith.sitofp %20 : vector<16x56xi32> to vector<16x56xf32>
    %22 = arith.addf %16, %21 : vector<16x56xf32>
    %23 = vector.extract_strided_slice %8 {offsets = [0, 2], sizes = [16, 1], strides = [1, 1]} : vector<16x8xi32> to vector<16x1xi32>
    %24 = vector.broadcast %23 : vector<16x1xi32> to vector<16x56xi32>
    %25 = arith.cmpi eq, %9, %24 : vector<16x56xi32>
    %26 = arith.extui %25 : vector<16x56xi1> to vector<16x56xi32>
    %27 = arith.sitofp %26 : vector<16x56xi32> to vector<16x56xf32>
    %28 = arith.addf %22, %27 : vector<16x56xf32>
    %29 = vector.extract_strided_slice %8 {offsets = [0, 3], sizes = [16, 1], strides = [1, 1]} : vector<16x8xi32> to vector<16x1xi32>
    %30 = vector.broadcast %29 : vector<16x1xi32> to vector<16x56xi32>
    %31 = arith.cmpi eq, %9, %30 : vector<16x56xi32>
    %32 = arith.extui %31 : vector<16x56xi1> to vector<16x56xi32>
    %33 = arith.sitofp %32 : vector<16x56xi32> to vector<16x56xf32>
    %34 = arith.addf %28, %33 : vector<16x56xf32>
    %35 = vector.extract_strided_slice %8 {offsets = [0, 4], sizes = [16, 1], strides = [1, 1]} : vector<16x8xi32> to vector<16x1xi32>
    %36 = vector.broadcast %35 : vector<16x1xi32> to vector<16x56xi32>
    %37 = arith.cmpi eq, %9, %36 : vector<16x56xi32>
    %38 = arith.extui %37 : vector<16x56xi1> to vector<16x56xi32>
    %39 = arith.sitofp %38 : vector<16x56xi32> to vector<16x56xf32>
    %40 = arith.addf %34, %39 : vector<16x56xf32>
    %41 = vector.extract_strided_slice %8 {offsets = [0, 5], sizes = [16, 1], strides = [1, 1]} : vector<16x8xi32> to vector<16x1xi32>
    %42 = vector.broadcast %41 : vector<16x1xi32> to vector<16x56xi32>
    %43 = arith.cmpi eq, %9, %42 : vector<16x56xi32>
    %44 = arith.extui %43 : vector<16x56xi1> to vector<16x56xi32>
    %45 = arith.sitofp %44 : vector<16x56xi32> to vector<16x56xf32>
    %46 = arith.addf %40, %45 : vector<16x56xf32>
    %47 = vector.extract_strided_slice %8 {offsets = [0, 6], sizes = [16, 1], strides = [1, 1]} : vector<16x8xi32> to vector<16x1xi32>
    %48 = vector.broadcast %47 : vector<16x1xi32> to vector<16x56xi32>
    %49 = arith.cmpi eq, %9, %48 : vector<16x56xi32>
    %50 = arith.extui %49 : vector<16x56xi1> to vector<16x56xi32>
    %51 = arith.sitofp %50 : vector<16x56xi32> to vector<16x56xf32>
    %52 = arith.addf %46, %51 : vector<16x56xf32>
    %53 = vector.extract_strided_slice %8 {offsets = [0, 7], sizes = [16, 1], strides = [1, 1]} : vector<16x8xi32> to vector<16x1xi32>
    %54 = vector.broadcast %53 : vector<16x1xi32> to vector<16x56xi32>
    %55 = arith.cmpi eq, %9, %54 : vector<16x56xi32>
    %56 = arith.extui %55 : vector<16x56xi1> to vector<16x56xi32>
    %57 = arith.sitofp %56 : vector<16x56xi32> to vector<16x56xf32>
    %58 = arith.addf %52, %57 : vector<16x56xf32>
    %cst_7 = arith.constant dense<0.000000e+00> : vector<16x32xf32>
    %59 = tpu.matmul %58, %0, %cst_7 {dimension_numbers = #tpu.dot_dimension_numbers<[1], [0], [0], [1], [0, 0, 1, 1], [], []>} : vector<16x56xf32>, vector<56x32xf32>, vector<16x32xf32> -> vector<16x32xf32>
    %cst_8 = arith.constant 1.250000e-01 : f32
    %60 = vector.broadcast %cst_8 : f32 to vector<16x32xf32>
    %61 = arith.mulf %59, %60 : vector<16x32xf32>
    %cst_9 = arith.constant dense<0.000000e+00> : vector<16x32xf32>
    %62 = tpu.matmul %61, %1, %cst_9 {dimension_numbers = #tpu.dot_dimension_numbers<[1], [0], [0], [1], [0, 0, 1, 1], [], []>} : vector<16x32xf32>, vector<32x32xf32>, vector<16x32xf32> -> vector<16x32xf32>
    %63 = vector.broadcast %2 : vector<1x32xf32> to vector<16x32xf32>
    %64 = arith.addf %62, %63 : vector<16x32xf32>
    %65 = arith.mulf %64, %64 : vector<16x32xf32>
    %cst_10 = arith.constant dense<0.000000e+00> : vector<16xf32>
    %66 = vector.multi_reduction <add>, %65, %cst_10 [1] : vector<16x32xf32> to vector<16xf32>
    %67 = vector.shape_cast %66 : vector<16xf32> to vector<16x1xf32>
    %cst_11 = arith.constant 1.000000e-24 : f32
    %68 = vector.broadcast %cst_11 : f32 to vector<16x1xf32>
    %69 = arith.maximumf %67, %68 : vector<16x1xf32>
    %70 = math.rsqrt %69 : vector<16x1xf32>
    %71 = vector.broadcast %70 : vector<16x1xf32> to vector<16x32xf32>
    %72 = arith.mulf %64, %71 : vector<16x32xf32>
    %cst_12 = arith.constant dense<0.000000e+00> : vector<16x16xf32>
    %73 = tpu.matmul %72, %72, %cst_12 {dimension_numbers = #tpu.dot_dimension_numbers<[1], [1], [0], [0], [0, 0, 1, 0], [], []>} : vector<16x32xf32>, vector<16x32xf32>, vector<16x16xf32> -> vector<16x16xf32>
    %74 = tpu.iota {dimensions = array<i32: 0>} : vector<16x16xi32>
    %75 = tpu.iota {dimensions = array<i32: 1>} : vector<16x16xi32>
    %76 = arith.subi %74, %75 : vector<16x16xi32>
    %c0_i32_13 = arith.constant 0 : i32
    %77 = vector.broadcast %c0_i32_13 : i32 to vector<16x16xi32>
    %78 = arith.cmpi eq, %76, %77 : vector<16x16xi32>
    %c8_i32 = arith.constant 8 : i32
    %79 = vector.broadcast %c8_i32 : i32 to vector<16x16xi32>
    %80 = arith.cmpi eq, %76, %79 : vector<16x16xi32>
    %c-8_i32 = arith.constant -8 : i32
    %81 = vector.broadcast %c-8_i32 : i32 to vector<16x16xi32>
    %82 = arith.cmpi eq, %76, %81 : vector<16x16xi32>
    %83 = arith.ori %80, %82 : vector<16x16xi1>
    %84 = arith.ori %78, %83 : vector<16x16xi1>
    %cst_14 = arith.constant 0.000000e+00 : f32
    %85 = vector.broadcast %cst_14 : f32 to vector<16x16xf32>
    %86 = arith.select %78, %73, %85 : vector<16x16xi1>, vector<16x16xf32>
    %cst_15 = arith.constant dense<0.000000e+00> : vector<16xf32>
    %87 = vector.multi_reduction <add>, %86, %cst_15 [1] : vector<16x16xf32> to vector<16xf32>
    %88 = vector.shape_cast %87 : vector<16xf32> to vector<16x1xf32>
    %cst_16 = arith.constant 0.000000e+00 : f32
    %89 = vector.broadcast %cst_16 : f32 to vector<16x16xf32>
    %90 = arith.select %83, %73, %89 : vector<16x16xi1>, vector<16x16xf32>
    %cst_17 = arith.constant dense<0.000000e+00> : vector<16xf32>
    %91 = vector.multi_reduction <add>, %90, %cst_17 [1] : vector<16x16xf32> to vector<16xf32>
    %92 = vector.shape_cast %91 : vector<16xf32> to vector<16x1xf32>
    %cst_18 = arith.constant -1.000000e+30 : f32
    %93 = vector.broadcast %cst_18 : f32 to vector<16x16xf32>
    %94 = arith.select %84, %93, %73 : vector<16x16xi1>, vector<16x16xf32>
    %cst_19 = arith.constant dense<0xFF800000> : vector<16xf32>
    %95 = vector.multi_reduction <maximumf>, %94, %cst_19 [1] : vector<16x16xf32> to vector<16xf32>
    %96 = vector.shape_cast %95 : vector<16xf32> to vector<16x1xf32>
    %97 = arith.subf %88, %92 : vector<16x1xf32>
    %98 = arith.subf %92, %96 : vector<16x1xf32>
    %99 = vector.shape_cast %92 : vector<16x1xf32> to vector<1x16x1xf32>
    %cst_20 = arith.constant dense<0.000000e+00> : vector<1xf32>
    %100 = vector.multi_reduction <add>, %99, %cst_20 [1, 2] : vector<1x16x1xf32> to vector<1xf32>
    %101 = vector.shape_cast %100 : vector<1xf32> to vector<1x1x1xf32>
    %102 = vector.extract %101[0, 0, 0] : f32 from vector<1x1x1xf32>
    %cst_21 = arith.constant 6.250000e-02 : f32
    %103 = arith.mulf %102, %cst_21 : f32
    %cst_22 = arith.constant 1.000000e+00 : f32
    %104 = arith.subf %cst_22, %103 : f32
    %105 = vector.broadcast %104 : f32 to vector<16x1xf32>
    %106 = arith.mulf %105, %97 : vector<16x1xf32>
    %cst_23 = arith.constant 1.000000e+00 : f32
    %107 = arith.subf %cst_23, %104 : f32
    %108 = vector.broadcast %107 : f32 to vector<16x1xf32>
    %109 = arith.mulf %108, %98 : vector<16x1xf32>
    %110 = arith.addf %106, %109 : vector<16x1xf32>
    %cst_24 = arith.constant 0.000000e+00 : f32
    %111 = vector.broadcast %cst_24 : f32 to vector<16x1xf32>
    %112 = arith.minimumf %110, %111 : vector<16x1xf32>
    %113 = math.absf %110 : vector<16x1xf32>
    %cst_25 = arith.constant 0.000000e+00 : f32
    %114 = vector.broadcast %cst_25 : f32 to vector<16x1xf32>
    %115 = arith.subf %114, %113 : vector<16x1xf32>
    %116 = math.exp %115 : vector<16x1xf32>
    %117 = math.log1p %116 : vector<16x1xf32>
    %118 = arith.subf %112, %117 : vector<16x1xf32>
    %119 = vector.shape_cast %118 : vector<16x1xf32> to vector<1x16x1xf32>
    %cst_26 = arith.constant dense<0.000000e+00> : vector<1xf32>
    %120 = vector.multi_reduction <add>, %119, %cst_26 [1, 2] : vector<1x16x1xf32> to vector<1xf32>
    %121 = vector.shape_cast %120 : vector<1xf32> to vector<1x1x1xf32>
    %122 = vector.extract %121[0, 0, 0] : f32 from vector<1x1x1xf32>
    %cst_27 = arith.constant 0.000000e+00 : f32
    %123 = arith.subf %cst_27, %122 : f32
    %cst_28 = arith.constant 6.250000e-02 : f32
    %124 = arith.mulf %123, %cst_28 : f32
    %125 = arith.cmpf ogt, %88, %92 : vector<16x1xf32>
    %126 = arith.extui %125 : vector<16x1xi1> to vector<16x1xi32>
    %127 = arith.sitofp %126 : vector<16x1xi32> to vector<16x1xf32>
    %128 = vector.shape_cast %127 : vector<16x1xf32> to vector<1x16x1xf32>
    %cst_29 = arith.constant dense<0.000000e+00> : vector<1xf32>
    %129 = vector.multi_reduction <add>, %128, %cst_29 [1, 2] : vector<1x16x1xf32> to vector<1xf32>
    %130 = vector.shape_cast %129 : vector<1xf32> to vector<1x1x1xf32>
    %131 = vector.extract %130[0, 0, 0] : f32 from vector<1x1x1xf32>
    %cst_30 = arith.constant dense<true> : vector<16x16xi1>
    %132 = arith.xori %84, %cst_30 : vector<16x16xi1>
    %133 = vector.broadcast %92 : vector<16x1xf32> to vector<16x16xf32>
    %134 = arith.cmpf ogt, %133, %73 : vector<16x16xf32>
    %135 = arith.andi %132, %134 : vector<16x16xi1>
    %136 = arith.extui %135 : vector<16x16xi1> to vector<16x16xi32>
    %137 = arith.sitofp %136 : vector<16x16xi32> to vector<16x16xf32>
    %138 = vector.shape_cast %137 : vector<16x16xf32> to vector<1x16x16xf32>
    %cst_31 = arith.constant dense<0.000000e+00> : vector<1xf32>
    %139 = vector.multi_reduction <add>, %138, %cst_31 [1, 2] : vector<1x16x16xf32> to vector<1xf32>
    %140 = vector.shape_cast %139 : vector<1xf32> to vector<1x1x1xf32>
    %141 = vector.extract %140[0, 0, 0] : f32 from vector<1x1x1xf32>
    %cst_32 = arith.constant 2.000000e+00 : f32
    %142 = arith.mulf %cst_32, %141 : f32
    %c0_33 = arith.constant 0 : index
    %143 = memref.load %arg3[%c0_33] : memref<3xf32, #tpu.memory_space<smem>>
    memref.store %124, %arg3[%c0_33] : memref<3xf32, #tpu.memory_space<smem>>
    %c1 = arith.constant 1 : index
    %144 = memref.load %arg3[%c1] : memref<3xf32, #tpu.memory_space<smem>>
    memref.store %131, %arg3[%c1] : memref<3xf32, #tpu.memory_space<smem>>
    %c2 = arith.constant 2 : index
    %145 = memref.load %arg3[%c2] : memref<3xf32, #tpu.memory_space<smem>>
    memref.store %142, %arg3[%c2] : memref<3xf32, #tpu.memory_space<smem>>
    return
  }
}

</mosaic_0001>

<llo_original>
// kernel: pretrain_forward.1
$region0: #{pretrain_forward.1}
  #allocation0 [shape = 'u32[]', space=smem, size = 0x4, offset = 0x4, fixed_abs, tag = 'smem constant byte address 0x4 - core index']
  #allocation1 [shape = 'u32[72,128]{1,0:T(1,128)}', space=vmem, size = 0x9000, scoped, tag = 'internal scratch']
  %s0 = inlined_call_operand.vmem [shape: f32[96,32], index: 0, kind: input, shape index: {}]
  %s1 = inlined_call_operand.vmem [shape: s32[16,8], index: 1, kind: input, shape index: {}]
  %s2 = inlined_call_operand.vmem [shape: s32[16,8], index: 2, kind: input, shape index: {}]
  %s3 = inlined_call_operand.vmem [shape: f32[3], index: 3, kind: output, shape index: {}]
  %s4 = sld [smem:[#allocation0]]
  $region22: #{pretrain_forward.1} parent=0
    _
  %s6 = ssub.s32 1, %s4
  %s7 = scalar_select 0, %s6, %s4
  $region1: #{pretrain_forward.1} parent=0
    #allocation2 [shape = 'u8[512]{0}', space=smem, size = 0x200, scoped, tag = 'output window, operand 0, single buffered']
    #allocation3 [shape = 's32[1]{0}', space=sflag, size = 0x4, scoped, tag = 'scoped memory for pretrain_forward.1']
    %8 = vsyncpa [#allocation3], 0
    // Predicated region
    $region2: #{pretrain_forward.1} parent=1 // pred_check
      _
    $region3: #{pretrain_forward.1} parent=1 // pred_check_branch
      %10 = sbr.rel (0) target = $region5
    $region4: #{pretrain_forward.1} parent=1 // pred_region
      _
    $region5: #{pretrain_forward.1} parent=1 // pred_fallthru
      _
    // Predicated region
    $region6: #{pretrain_forward.1} parent=1 // pred_check
      _
    $region7: #{pretrain_forward.1} parent=1 // pred_check_branch
      %12 = sbr.rel (0) target = $region9
    $region8: #{pretrain_forward.1} parent=1 // pred_region
      _
    $region9: #{pretrain_forward.1} parent=1 // pred_fallthru
      _
    // Predicated region
    $region10: #{pretrain_forward.1} parent=1 // pred_check
      _
    $region11: #{pretrain_forward.1} parent=1 // pred_check_branch
      %14 = sbr.rel (0) target = $region13
    $region12: #{pretrain_forward.1} parent=1 // pred_region
      _
    $region13: #{pretrain_forward.1} parent=1 // pred_fallthru
      _
    %v15 = vld [vmem:[%s0] sm:$0xff]
    %v16 = vld [vmem:[%s0 + $0x8] sm:$0xff]
    %v17 = vld [vmem:[%s0 + $0x10] sm:$0xff]
    %v18 = vld [vmem:[%s0 + $0x18] sm:$0xff]
    %v19 = vld [vmem:[%s0 + $0x20] sm:$0xff]
    %v20 = vld [vmem:[%s0 + $0x28] sm:$0xff]
    %v21 = vld [vmem:[%s0 + $0x30] sm:$0xff]
    %v22 = vld [vmem:[%s0 + $0x38] sm:$0xff]
    %v23 = vld [vmem:[%s0 + $0x40] sm:$0xff]
    %v24 = vld [vmem:[%s0 + $0x48] sm:$0xff]
    %v25 = vld [vmem:[%s0 + $0x50] sm:$0xff]
    %v26 = vld [vmem:[%s0 + $0x58] sm:$0x1]
    %v27 = vld [vmem:[%s1] sm:$0xff]
    %v28 = vld [vmem:[%s1 + $0x8] sm:$0xff]
    %v29 = vld [vmem:[%s2] sm:$0xff]
    %v30 = vld [vmem:[%s2 + $0x8] sm:$0xff]
    %vm31 = vcmp.ne.s32.totalorder %v29, 0
    %vm32 = vcmp.ne.s32.totalorder %v30, 0
    %v33 = vsel %vm31, 50, %v27
    %v34 = vsel %vm32, 50, %v28
    %v35 = vlaneseq
    %v36 = vand.u32 %v35, 127
    %37 = vset.pattern.permute.xlu0 0
    %38 = vperm.xlu0 %37, %v33
    %v39 = vpop.permute.xlu0 %38
    %40 = vset.pattern.permute.xlu0 0
    %41 = vperm.xlu0 %40, %v34
    %v42 = vpop.permute.xlu0 %41
    %vm43 = vcmp.eq.s32.totalorder %v36, %v39
    %vm44 = vcmp.eq.s32.totalorder %v36, %v42
    %v45 = vsel %vm43, 1, 0
    %v46 = vsel %vm44, 1, 0
    %v47 = vcvt.s32.f32 %v45
    %v48 = vcvt.s32.f32 %v46
    %v49 = vadd.f32 %v47, 0.0
    %v50 = vadd.f32 %v48, 0.0
    %51 = vset.pattern.permute.xlu0 1
    %52 = vperm.xlu0 %51, %v33
    %v53 = vpop.permute.xlu0 %52
    %54 = vset.pattern.permute.xlu0 1
    %55 = vperm.xlu0 %54, %v34
    %v56 = vpop.permute.xlu0 %55
    %vm57 = vcmp.eq.s32.totalorder %v36, %v53
    %vm58 = vcmp.eq.s32.totalorder %v36, %v56
    %v59 = vsel %vm57, 1, 0
    %v60 = vsel %vm58, 1, 0
    %v61 = vcvt.s32.f32 %v59
    %v62 = vcvt.s32.f32 %v60
    %v63 = vadd.f32 %v49, %v61
    %v64 = vadd.f32 %v50, %v62
    %65 = vset.pattern.permute.xlu0 2
    %66 = vperm.xlu0 %65, %v33
    %v67 = vpop.permute.xlu0 %66
    %68 = vset.pattern.permute.xlu0 2
    %69 = vperm.xlu0 %68, %v34
    %v70 = vpop.permute.xlu0 %69
    %vm71 = vcmp.eq.s32.totalorder %v36, %v67
    %vm72 = vcmp.eq.s32.totalorder %v36, %v70
    %v73 = vsel %vm71, 1, 0
    %v74 = vsel %vm72, 1, 0
    %v75 = vcvt.s32.f32 %v73
    %v76 = vcvt.s32.f32 %v74
    %v77 = vadd.f32 %v63, %v75
    %v78 = vadd.f32 %v64, %v76
    %79 = vset.pattern.permute.xlu0 3
    %80 = vperm.xlu0 %79, %v33
    %v81 = vpop.permute.xlu0 %80
    %82 = vset.pattern.permute.xlu0 3
    %83 = vperm.xlu0 %82, %v34
    %v84 = vpop.permute.xlu0 %83
    %vm85 = vcmp.eq.s32.totalorder %v36, %v81
    %vm86 = vcmp.eq.s32.totalorder %v36, %v84
    %v87 = vsel %vm85, 1, 0
    %v88 = vsel %vm86, 1, 0
    %v89 = vcvt.s32.f32 %v87
    %v90 = vcvt.s32.f32 %v88
    %v91 = vadd.f32 %v77, %v89
    %v92 = vadd.f32 %v78, %v90
    %93 = vset.pattern.permute.xlu0 4
    %94 = vperm.xlu0 %93, %v33
    %v95 = vpop.permute.xlu0 %94
    %96 = vset.pattern.permute.xlu0 4
    %97 = vperm.xlu0 %96, %v34
    %v98 = vpop.permute.xlu0 %97
    %vm99 = vcmp.eq.s32.totalorder %v36, %v95
    %vm100 = vcmp.eq.s32.totalorder %v36, %v98
    %v101 = vsel %vm99, 1, 0
    %v102 = vsel %vm100, 1, 0
    %v103 = vcvt.s32.f32 %v101
    %v104 = vcvt.s32.f32 %v102
    %v105 = vadd.f32 %v91, %v103
    %v106 = vadd.f32 %v92, %v104
    %107 = vset.pattern.permute.xlu0 5
    %108 = vperm.xlu0 %107, %v33
    %v109 = vpop.permute.xlu0 %108
    %110 = vset.pattern.permute.xlu0 5
    %111 = vperm.xlu0 %110, %v34
    %v112 = vpop.permute.xlu0 %111
    %vm113 = vcmp.eq.s32.totalorder %v36, %v109
    %vm114 = vcmp.eq.s32.totalorder %v36, %v112
    %v115 = vsel %vm113, 1, 0
    %v116 = vsel %vm114, 1, 0
    %v117 = vcvt.s32.f32 %v115
    %v118 = vcvt.s32.f32 %v116
    %v119 = vadd.f32 %v105, %v117
    %v120 = vadd.f32 %v106, %v118
    %121 = vset.pattern.permute.xlu0 6
    %122 = vperm.xlu0 %121, %v33
    %v123 = vpop.permute.xlu0 %122
    %124 = vset.pattern.permute.xlu0 6
    %125 = vperm.xlu0 %124, %v34
    %v126 = vpop.permute.xlu0 %125
    %vm127 = vcmp.eq.s32.totalorder %v36, %v123
    %vm128 = vcmp.eq.s32.totalorder %v36, %v126
    %v129 = vsel %vm127, 1, 0
    %v130 = vsel %vm128, 1, 0
    %v131 = vcvt.s32.f32 %v129
    %v132 = vcvt.s32.f32 %v130
    %v133 = vadd.f32 %v119, %v131
    %v134 = vadd.f32 %v120, %v132
    %135 = vset.pattern.permute.xlu0 7
    %136 = vperm.xlu0 %135, %v33
    %v137 = vpop.permute.xlu0 %136
    %138 = vset.pattern.permute.xlu0 7
    %139 = vperm.xlu0 %138, %v34
    %v140 = vpop.permute.xlu0 %139
    %vm141 = vcmp.eq.s32.totalorder %v36, %v137
    %vm142 = vcmp.eq.s32.totalorder %v36, %v140
    %v143 = vsel %vm141, 1, 0
    %v144 = vsel %vm142, 1, 0
    %v145 = vcvt.s32.f32 %v143
    %v146 = vcvt.s32.f32 %v144
    %v147 = vadd.f32 %v133, %v145
    %v148 = vadd.f32 %v134, %v146
    %vm149 = vcmask 457728
    %v151 = vsel %vm149, %v147, 0
    %v154 = vsel %vm149, %v148, 0
    %156 = vmatpush.msra.mxu0 0.0
    %157 = vmatpush.msra.mxu0 0.0
    %158 = vmatpush.msra.mxu0 0.0
    %159 = vmatpush.msra.mxu0 0.0
    %160 = vmatpush.msra.mxu0 0.0
    %161 = vmatpush.msra.mxu0 0.0
    %162 = vmatpush.msra.mxu0 0.0
    %163 = vmatpush.msra.mxu0 0.0
    %164 = vmatpush.msra.mxu0 0.0
    %165 = vmatpush.msra.mxu0 %v21
    %166 = vmatpush.msra.mxu0 %v20
    %167 = vmatpush.msra.mxu0 %v19
    %168 = vmatpush.msra.mxu0 %v18
    %169 = vmatpush.msra.mxu0 %v17
    %170 = vmatpush.msra.mxu0 %v16
    %171 = vmatpush.msra.mxu0 %v15
    %172 = vmatmul.f32.gmra.mxu0 %v151
    %v173 = vpop.f32.mrf.mxu0
    %v174 = vadd.f32 0.0, %v173
    %175 = vmatmul.f32.gmra.mxu0 %v154
    %v176 = vpop.f32.mrf.mxu0
    %v177 = vadd.f32 0.0, %v176
    %178 = vdwg.mxu0
    %v179 = vmul.f32 %v174, 0.125
    %v180 = vmul.f32 %v177, 0.125
    %v181 = vperm.slane %v26, 0
    %vm182 = vcmask 261120
    %v184 = vsel %vm182, %v179, 0
    %v187 = vsel %vm182, %v180, 0
    %189 = vmatpush.msra.mxu0 0.0
    %190 = vmatpush.msra.mxu0 0.0
    %191 = vmatpush.msra.mxu0 0.0
    %192 = vmatpush.msra.mxu0 0.0
    %193 = vmatpush.msra.mxu0 0.0
    %194 = vmatpush.msra.mxu0 0.0
    %195 = vmatpush.msra.mxu0 0.0
    %196 = vmatpush.msra.mxu0 0.0
    %197 = vmatpush.msra.mxu0 0.0
    %198 = vmatpush.msra.mxu0 0.0
    %199 = vmatpush.msra.mxu0 0.0
    %200 = vmatpush.msra.mxu0 0.0
    %201 = vmatpush.msra.mxu0 %v25
    %202 = vmatpush.msra.mxu0 %v24
    %203 = vmatpush.msra.mxu0 %v23
    %204 = vmatpush.msra.mxu0 %v22
    %205 = vmatmul.f32.gmra.mxu0 %v184
    %v206 = vpop.f32.mrf.mxu0
    %v207 = vadd.f32 %v181, %v206
    %208 = vmatmul.f32.gmra.mxu0 %v187
    %v209 = vpop.f32.mrf.mxu0
    %v210 = vadd.f32 %v181, %v209
    %211 = vdwg.mxu0
    %v212 = vmul.f32 %v207, %v207
    %v213 = vmul.f32 %v210, %v210
    %v214 = vsel %vm182, %v212, 0.0
    %215 = vadd.xlane.f32.xlu0 %v214
    %v216 = vpop.xlane.xlu0 %215
    %v217 = vsel %vm182, %v213, 0.0
    %218 = vadd.xlane.f32.xlu0 %v217
    %v219 = vpop.xlane.xlu0 %218
    %v220 = vmax.f32 %v216, 1e-24
    %v221 = vmax.f32 %v219, 1e-24
    %v222 = vrsqrt.pop %v220
    %v223 = vmul.f32 %v222, %v220
    %v224 = vmul.f32 %v223, %v222
    %v225 = vmul.f32 0.5, %v224
    %v226 = vsub.f32 1.5, %v225
    %v227 = vmul.f32 %v222, %v226
    %vm228 = vweird.f32 %v220
    %vm229 = vweird.f32 %v222
    %vm230 = vmor %vm228, %vm229
    %v231 = vsel %vm230, %v222, %v227
    %v232 = vrsqrt.pop %v221
    %v233 = vmul.f32 %v232, %v221
    %v234 = vmul.f32 %v233, %v232
    %v235 = vmul.f32 0.5, %v234
    %v236 = vsub.f32 1.5, %v235
    %v237 = vmul.f32 %v232, %v236
    %vm238 = vweird.f32 %v221
    %vm239 = vweird.f32 %v232
    %vm240 = vmor %vm238, %vm239
    %v241 = vsel %vm240, %v232, %v237
    %v242 = vmul.f32 %v207, %v231
    %v243 = vmul.f32 %v210, %v241
    %v245 = vsel %vm182, %v242, 0
    %v248 = vsel %vm182, %v243, 0
    %250 = vmatpush.xpose.msra.mxu0 0.0
    %251 = vmatpush.xpose.msra.mxu0 0.0
    %252 = vmatpush.xpose.msra.mxu0 0.0
    %253 = vmatpush.xpose.msra.mxu0 0.0
    %254 = vmatpush.xpose.msra.mxu0 0.0
    %255 = vmatpush.xpose.msra.mxu0 0.0
    %256 = vmatpush.xpose.msra.mxu0 0.0
    %257 = vmatpush.xpose.msra.mxu0 0.0
    %258 = vmatpush.xpose.msra.mxu0 0.0
    %259 = vmatpush.xpose.msra.mxu0 0.0
    %260 = vmatpush.xpose.msra.mxu0 0.0
    %261 = vmatpush.xpose.msra.mxu0 0.0
    %262 = vmatpush.xpose.msra.mxu0 0.0
    %263 = vmatpush.xpose.msra.mxu0 0.0
    %264 = vmatpush.xpose.msra.mxu0 %v248
    %265 = vmatpush.xpose.msra.mxu0 %v245
    %266 = vmatmul.f32.gmra.mxu0 %v245
    %v267 = vpop.f32.mrf.mxu0
    %v268 = vadd.f32 0.0, %v267
    %269 = vmatmul.f32.gmra.mxu0 %v248
    %v270 = vpop.f32.mrf.mxu0
    %v271 = vadd.f32 0.0, %v270
    %272 = vdwg.mxu0
    %v273 = vlaneseq
    %v274 = vshrl.u32 %v273, 7
    %v275 = vadd.s32 %v274, 8
    %v276 = vsub.s32 %v274, %v36
    %v277 = vsub.s32 %v275, %v36
    %vm278 = vcmp.eq.s32.totalorder %v276, 0
    %vm279 = vcmp.eq.s32.totalorder %v277, 0
    %vm280 = vcmp.eq.s32.totalorder %v276, 8
    %vm281 = vcmp.eq.s32.totalorder %v277, 8
    %vm282 = vcmp.eq.s32.totalorder %v276, 4294967288
    %vm283 = vcmp.eq.s32.totalorder %v277, 4294967288
    %vm284 = vmor %vm280, %vm282
    %vm285 = vmor %vm281, %vm283
    %vm286 = vmor %vm278, %vm284
    %vm287 = vmor %vm279, %vm285
    %v288 = vsel %vm278, %v268, 0.0
    %v289 = vsel %vm279, %v271, 0.0
    %vm290 = vcmask 130048
    %v291 = vsel %vm290, %v288, 0.0
    %292 = vadd.xlane.f32.xlu0 %v291
    %v293 = vpop.xlane.xlu0 %292
    %v294 = vsel %vm290, %v289, 0.0
    %295 = vadd.xlane.f32.xlu0 %v294
    %v296 = vpop.xlane.xlu0 %295
    %v297 = vsel %vm284, %v268, 0.0
    %v298 = vsel %vm285, %v271, 0.0
    %v299 = vsel %vm290, %v297, 0.0
    %300 = vadd.xlane.f32.xlu0 %v299
    %v301 = vpop.xlane.xlu0 %300
    %v302 = vsel %vm290, %v298, 0.0
    %303 = vadd.xlane.f32.xlu0 %v302
    %v304 = vpop.xlane.xlu0 %303
    %v305 = vsel %vm286, -1e+30, %v268
    %v306 = vsel %vm287, -1e+30, %v271
    %v307 = vsel %vm290, %v305, -inf
    %308 = vmax.xlane.f32.xlu0 %v307
    %v309 = vpop.xlane.xlu0 %308
    %v310 = vsel %vm290, %v306, -inf
    %311 = vmax.xlane.f32.xlu0 %v310
    %v312 = vpop.xlane.xlu0 %311
    %v313 = vsub.f32 %v293, %v301
    %v314 = vsub.f32 %v296, %v304
    %v315 = vsub.f32 %v301, %v309
    %v316 = vsub.f32 %v304, %v312
    %vm317 = vcmask 7168
    %v318 = vsel %vm317, %v301, 0.0
    %v319 = vsel %vm317, %v304, 0.0
    %v320 = vadd.f32 %v318, %v319
    %321 = vadd.xlane.f32.xlu0 %v320
    %v322 = vpop.xlane.xlu0 %321
    %v323 = vrot.slane %v322, 4
    %v324 = vadd.f32 %v322, %v323
    %v325 = vrot.slane %v324, 2
    %v326 = vadd.f32 %v324, %v325
    %v327 = vrot.slane %v326, 1
    %v328 = vadd.f32 %v326, %v327
    %s329 = vtos %v328
    %s330 = smul.f32 %s329, 0.0625
    %s331 = ssub.f32 1.0, %s330
    %v332 = vstv %s331
    %v333 = vmul.f32 %v332, %v313
    %v334 = vmul.f32 %v332, %v314
    %s335 = ssub.f32 1.0, %s331
    %v336 = vstv %s335
    %v337 = vmul.f32 %v336, %v315
    %v338 = vmul.f32 %v336, %v316
    %v339 = vadd.f32 %v333, %v337
    %v340 = vadd.f32 %v334, %v338
    %v341 = vmin.f32 %v339, 0.0
    %v342 = vmin.f32 %v340, 0.0
    %v343 = vand.u32 2147483647, %v339
    %v344 = vand.u32 2147483647, %v340
    %v345 = vsub.f32 0.0, %v343
    %v346 = vsub.f32 0.0, %v344
    %v347 = vmul.f32 %v345, 1.442695
    %v348 = vpow.pop %v347
    %v349 = vmul.f32 %v346, 1.442695
    %v350 = vpow.pop %v349
    %v351 = vadd.f32 %v348, 1.0
    %v352 = vlog2.pop %v351
    %v353 = vmul.f32 %v352, 0.6931472
    %v354 = vmul.f32 -0.5, %v348
    %v355 = vadd.f32 %v354, 1.0
    %v356 = vmul.f32 %v355, %v348
    %v357 = vand.u32 2147483647, %v348
    %vm358 = vcmp.lt.f32.partialorder %v357, 0.0004427343
    %v359 = vsel %vm358, %v356, %v353
    %v360 = vadd.f32 %v350, 1.0
    %v361 = vlog2.pop %v360
    %v362 = vmul.f32 %v361, 0.6931472
    %v363 = vmul.f32 -0.5, %v350
    %v364 = vadd.f32 %v363, 1.0
    %v365 = vmul.f32 %v364, %v350
    %v366 = vand.u32 2147483647, %v350
    %vm367 = vcmp.lt.f32.partialorder %v366, 0.0004427343
    %v368 = vsel %vm367, %v365, %v362
    %v369 = vsub.f32 %v341, %v359
    %v370 = vsub.f32 %v342, %v368
    %v371 = vsel %vm317, %v369, 0.0
    %v372 = vsel %vm317, %v370, 0.0
    %v373 = vadd.f32 %v371, %v372
    %374 = vadd.xlane.f32.xlu0 %v373
    %v375 = vpop.xlane.xlu0 %374
    %v376 = vrot.slane %v375, 4
    %v377 = vadd.f32 %v375, %v376
    %v378 = vrot.slane %v377, 2
    %v379 = vadd.f32 %v377, %v378
    %v380 = vrot.slane %v379, 1
    %v381 = vadd.f32 %v379, %v380
    %s382 = vtos %v381
    %s383 = ssub.f32 0.0, %s382
    %s384 = smul.f32 %s383, 0.0625
    %vm385 = vcmp.gt.f32.partialorder %v293, %v301
    %vm386 = vcmp.gt.f32.partialorder %v296, %v304
    %v387 = vsel %vm385, 1, 0
    %v388 = vsel %vm386, 1, 0
    %v389 = vcvt.s32.f32 %v387
    %v390 = vcvt.s32.f32 %v388
    %v391 = vsel %vm317, %v389, 0.0
    %v392 = vsel %vm317, %v390, 0.0
    %v393 = vadd.f32 %v391, %v392
    %394 = vadd.xlane.f32.xlu0 %v393
    %v395 = vpop.xlane.xlu0 %394
    %v396 = vrot.slane %v395, 4
    %v397 = vadd.f32 %v395, %v396
    %v398 = vrot.slane %v397, 2
    %v399 = vadd.f32 %v397, %v398
    %v400 = vrot.slane %v399, 1
    %v401 = vadd.f32 %v399, %v400
    %s402 = vtos %v401
    %vm403 = vmxor %vm286, 1
    %vm404 = vmxor %vm287, 1
    %vm405 = vcmp.gt.f32.partialorder %v301, %v268
    %vm406 = vcmp.gt.f32.partialorder %v304, %v271
    %vm407 = vmand %vm403, %vm405
    %vm408 = vmand %vm404, %vm406
    %v409 = vsel %vm407, 1, 0
    %v410 = vsel %vm408, 1, 0
    %v411 = vcvt.s32.f32 %v409
    %v412 = vcvt.s32.f32 %v410
    %v413 = vsel %vm290, %v411, 0.0
    %v414 = vsel %vm290, %v412, 0.0
    %v415 = vadd.f32 %v413, %v414
    %416 = vadd.xlane.f32.xlu0 %v415
    %v417 = vpop.xlane.xlu0 %416
    %v418 = vrot.slane %v417, 4
    %v419 = vadd.f32 %v417, %v418
    %v420 = vrot.slane %v419, 2
    %v421 = vadd.f32 %v419, %v420
    %v422 = vrot.slane %v421, 1
    %v423 = vadd.f32 %v421, %v422
    %s424 = vtos %v423
    %s425 = smul.f32 %s424, 2.0
    %s426 = scalar_lea.smem [#allocation2], 0
    %427 = sst [smem:[%s426]] %s384
    %s428 = scalar_lea.smem [#allocation2], 1
    %429 = sst [smem:[%s428]] %s402
    %s430 = scalar_lea.smem [#allocation2], 2
    %431 = sst [smem:[%s430]] %s425
    // Predicated region
    $region14: #{pretrain_forward.1} parent=1 // pred_check
      _
    $region15: #{pretrain_forward.1} parent=1 // pred_check_branch
      %433 = sbr.rel (0) target = $region17
    $region16: #{pretrain_forward.1} parent=1 // pred_region
      %435 = vsyncadd [#allocation3], 0
      %s437 = sshll.u32 %s3, 4
      %s438 = int_to_ptr.vmem [resolvable:$true] %s437
      %440 = dma.smem_to_vmem [#allocation2], 16, %s438, [#allocation3]
    $region17: #{pretrain_forward.1} parent=1 // pred_fallthru
      _
    // Predicated region
    $region18: #{pretrain_forward.1} parent=1 // pred_check
      _
    $region19: #{pretrain_forward.1} parent=1 // pred_check_branch
      %442 = sbr.rel (0) target = $region21
    $region20: #{pretrain_forward.1} parent=1 // pred_region
      %444 = dma.done [#allocation3], 16
    $region21: #{pretrain_forward.1} parent=1 // pred_fallthru
      _
    %445 = sfence
    %446 = vsyncpa [#allocation3], 1

</llo_original>
